<compile_context>
chip_gen: v5e
topology: v5e:2x2
jax: 0.10.0
libtpu: 0.0.40
codegen_flags: <defaults>
</compile_context>

<pallas_src>
import functools

import jax
import jax.numpy as jnp
import numpy as np
from jax.experimental import pallas as pl
from jax.experimental.pallas import tpu as pltpu


# --------------------------------------------------------------------------
# Kernel
# --------------------------------------------------------------------------
def _rope_kernel(x_ref, tab_ref, o_ref):
    # x_ref:   (1, tT, H, D)  input tile
    # tab_ref: (2, tT, D)     fused table: tab[0] = [cos, cos], tab[1] = [sin, -sin]
    # o_ref:   (1, tT, H, D)  output tile
    cdt = tab_ref.dtype                     # compute dtype: bf16 for bf16 x, else f32
    x = x_ref[...]
    if x.dtype != cdt:
        x = x.astype(cdt)
    half = x.shape[-1] // 2

    # Half-swap along the lane axis: [x2, x1].  Static rotation by D/2
    # (equivalent to pltpu.roll with a positive axis); the sign is folded into
    # the table so the per-element cost is 2 mul + 1 add + the swap.
    x_rot = jnp.concatenate([x[..., half:], x[..., :half]], axis=-1)

    cos_full = tab_ref[0][:, None, :]       # (tT, 1, D) -> broadcast over heads
    sin_sgn = tab_ref[1][:, None, :]        # (tT, 1, D)

    # first half:  x1*cos + x2*sin   ;   second half:  x2*cos - x1*sin
    o_ref[...] = (x * cos_full + x_rot * sin_sgn).astype(o_ref.dtype)


# --------------------------------------------------------------------------
# Tables (numpy, built once per (T, D, base) -> safe under jit / lru_cache)
# --------------------------------------------------------------------------
@functools.lru_cache(maxsize=32)
def _rope_table_np(seq_len: int, dim: int, base: float) -> np.ndarray:
    """Fused (2, T, D) float32 table: [ [cos, cos], [sin, -sin] ]."""
    inv_freq = (1.0 / base) ** (np.arange(0, dim, 2, dtype=np.float32) / np.float32(dim))
    t = np.arange(seq_len, dtype=np.float32)
    freqs = np.outer(t, inv_freq)                       # (T, D//2)
    cos, sin = np.cos(freqs), np.sin(freqs)
    cos_full = np.concatenate([cos, cos], axis=-1)      # (T, D)
    sin_sgn = np.concatenate([sin, -sin], axis=-1)      # (T, D)
    return np.stack([cos_full, sin_sgn], axis=0).astype(np.float32)


# --------------------------------------------------------------------------
# Sizing helpers (sublane/lane-padding aware)
# --------------------------------------------------------------------------
def _round_up(n: int, m: int) -> int:
    return ((n + m - 1) // m) * m


def _sublane(itemsize: int) -> int:
    # packed dtypes pad the second-minor dim further: 8 (4B), 16 (2B), 32 (1B)
    return {1: 32, 2: 16, 4: 8}.get(itemsize, 8)


def _vmem_cap_bytes() -> int:
    """75% of device VMEM (~48 MiB on v7x, ~96 MiB on v5e/v6e); safe fallback."""
    try:
        cap = int(pltpu.get_tpu_info().vmem_capacity_bytes)
    except Exception:
        cap = 64 << 20  # assume the smallest (v7x per-core) if undetectable
    return (cap * 3) // 4


def _choose_tile_t(T: int, row_in: int, row_out: int, row_tab: int,
                   target_tile_bytes: int, vmem_budget: int) -> int:
    """Largest multiple-of-8 tT (or T itself) that fits both the per-tile
    target and the double-buffered VMEM budget.  Works with pl.cdiv grids, so
    tT does not need to divide T."""
    per_row = 2 * (row_in + row_out + row_tab)          # 2x = double buffering
    rows = min(target_tile_bytes // max(row_in, 1),
               vmem_budget // max(per_row, 1))
    if rows >= T or T <= 8:
        return T
    return max(8, (rows // 8) * 8)


# --------------------------------------------------------------------------
# Wrapper
# --------------------------------------------------------------------------
def rotary_embedding(x: jax.Array, base: float = 10000.0, *,
                     target_tile_bytes: int = 8 << 20,
                     donate_input: bool = False) -> jax.Array:
    """x: [B, T, H, D] -> rotary-embedded output, same shape & dtype as x."""
    B, T, H, D = x.shape
    assert D % 2 == 0, "head dim must be even for RoPE"

    # bf16 inputs compute natively in bf16 (v6e/v7x VPUs are bf16-native);
    # everything else goes through f32.
    compute_dtype = jnp.bfloat16 if x.dtype == jnp.bfloat16 else jnp.float32
    tab = jnp.asarray(_rope_table_np(int(T), int(D), float(base)),
                      dtype=compute_dtype)              # (2, T, D)

    itemsize = x.dtype.itemsize
    tab_itemsize = jnp.dtype(compute_dtype).itemsize

    # Padded VMEM footprint per sequence position (the (H, D) slab pads H up
    # to the sublane tile and D up to 128 lanes).
    Dp = _round_up(D, 128)
    Hp = _round_up(H, _sublane(itemsize))
    row_x = Hp * Dp * itemsize                          # one (H, D) slab of x / out
    row_tab = 2 * Dp * tab_itemsize                     # fused cos/sin row

    vmem_cap = _vmem_cap_bytes()
    tT = _choose_tile_t(T, row_x, row_x, row_tab, target_tile_bytes, vmem_cap)

    # Sequence tiles OUTER, batch INNER: the table block index is constant
    # across the inner batch loop, so it is fetched once per sequence tile.
    grid = (pl.cdiv(T, tT), B)

    footprint = 2 * tT * (2 * row_x + row_tab) + (2 << 20)   # + headroom
    vmem_limit = int(min(max(footprint, 16 << 20), vmem_cap))

    extra_kwargs = {}
    if donate_input:
        # RoPE is usually applied "in place"; avoids a second HBM buffer.
        extra_kwargs["input_output_aliases"] = {0: 0}

    return pl.pallas_call(
        _rope_kernel,
        out_shape=jax.ShapeDtypeStruct((B, T, H, D), x.dtype),
        grid_spec=pltpu.PrefetchScalarGridSpec(
            num_scalar_prefetch=0,
            grid=grid,
            in_specs=[
                pl.BlockSpec((1, tT, H, D), lambda t, b: (b, t, 0, 0)),
                pl.BlockSpec((2, tT, D), lambda t, b: (0, t, 0)),
            ],
            out_specs=pl.BlockSpec((1, tT, H, D), lambda t, b: (b, t, 0, 0)),
        ),
        compiler_params=pltpu.CompilerParams(
            dimension_semantics=("parallel", "arbitrary"),
            vmem_limit_bytes=vmem_limit,
        ),
        **extra_kwargs,
    )(x, tab)


# --------------------------------------------------------------------------
# Pure-JAX reference mirroring the PyTorch forward
# --------------------------------------------------------------------------
def rotary_embedding_ref(x: jax.Array, base: float = 10000.0) -> jax.Array:
    B, T, H, D = x.shape
    half = D // 2
    inv_freq = (1.0 / base) ** (jnp.arange(0, D, 2, dtype=jnp.float32) / D)
    t = jnp.arange(T, dtype=jnp.float32)
    freqs = jnp.outer(t, inv_freq)
    cos = jnp.cos(freqs)[None, :, None, :]
    sin = jnp.sin(freqs)[None, :, None, :]
    x1 = x[..., :half].astype(jnp.float32)
    x2 = x[..., half:].astype(jnp.float32)
    y1 = x1 * cos + x2 * sin
    y2 = -x1 * sin + x2 * cos
    return jnp.concatenate([y1, y2], axis=-1).astype(x.dtype)


if __name__ == "__main__":
    key = jax.random.PRNGKey(0)
    B, T, H, D = 2, 8, 4, 32  # dim passed to RotaryEmbedding == head dim D
    x = jax.random.normal(key, (B, T, H, D), dtype=jnp.float32)

    # f32 path
    out = jax.block_until_ready(rotary_embedding(x))
    ref = rotary_embedding_ref(x)
    assert out.shape == x.shape and out.dtype == x.dtype
    assert jnp.allclose(out, ref, atol=1e-5, rtol=1e-5), "f32 mismatch vs reference"

    # bf16 path (native bf16 compute in the kernel)
    xb = x.astype(jnp.bfloat16)
    out_b = jax.block_until_ready(rotary_embedding(xb))
    ref_b = rotary_embedding_ref(xb)
    assert out_b.shape == xb.shape and out_b.dtype == jnp.bfloat16
    assert jnp.allclose(out_b.astype(jnp.float32), ref_b.astype(jnp.float32),
                        atol=0.15, rtol=0.1), "bf16 mismatch vs reference"

    print("KERNEL_OK")
</pallas_src>

<mosaic_0001>
module attributes {stable_mosaic.version = 11 : i64} {
  func.func @_rope_kernel(%arg0: i32, %arg1: i32, %arg2: memref<1x8x4x32xf32, #tpu.memory_space<vmem>>, %arg3: memref<2x8x32xf32, #tpu.memory_space<vmem>>, %arg4: memref<1x8x4x32xf32, #tpu.memory_space<vmem>>) attributes {dimension_semantics = [#tpu.dimension_semantics<parallel>, #tpu.dimension_semantics<arbitrary>], iteration_bounds = array<i64: 1, 2>, scalar_prefetch = 0 : i64, scratch_operands = 0 : i64, tpu.core_type = #tpu.core_type<tc>, window_params = [{transform_indices = @transform_0, window_bounds = array<i64: 1, 8, 4, 32>}, {transform_indices = @transform_1, window_bounds = array<i64: 2, 8, 32>}, {transform_indices = @transform_2, window_bounds = array<i64: 1, 8, 4, 32>}]} {
    %c0 = arith.constant 0 : index
    %c0_0 = arith.constant 0 : index
    %c0_1 = arith.constant 0 : index
    %c0_2 = arith.constant 0 : index
    %0 = vector.load %arg2[%c0, %c0_0, %c0_1, %c0_2] : memref<1x8x4x32xf32, #tpu.memory_space<vmem>>, vector<1x8x4x32xf32>
    %1 = vector.extract_strided_slice %0 {offsets = [0, 0, 0, 16], sizes = [1, 8, 4, 16], strides = [1, 1, 1, 1]} : vector<1x8x4x32xf32> to vector<1x8x4x16xf32>
    %2 = vector.extract_strided_slice %0 {offsets = [0, 0, 0, 0], sizes = [1, 8, 4, 16], strides = [1, 1, 1, 1]} : vector<1x8x4x32xf32> to vector<1x8x4x16xf32>
    %3 = tpu.concatenate %1, %2 in 3 : vector<1x8x4x16xf32>, vector<1x8x4x16xf32> -> vector<1x8x4x32xf32>
    %c0_3 = arith.constant 0 : index
    %c0_4 = arith.constant 0 : index
    %c0_5 = arith.constant 0 : index
    %4 = vector.load %arg3[%c0_3, %c0_4, %c0_5] : memref<2x8x32xf32, #tpu.memory_space<vmem>>, vector<1x8x32xf32>
    %5 = vector.shape_cast %4 : vector<1x8x32xf32> to vector<8x32xf32>
    %6 = vector.shape_cast %5 : vector<8x32xf32> to vector<8x1x32xf32>
    %c1 = arith.constant 1 : index
    %c0_6 = arith.constant 0 : index
    %c0_7 = arith.constant 0 : index
    %7 = vector.load %arg3[%c1, %c0_6, %c0_7] : memref<2x8x32xf32, #tpu.memory_space<vmem>>, vector<1x8x32xf32>
    %8 = vector.shape_cast %7 : vector<1x8x32xf32> to vector<8x32xf32>
    %9 = vector.shape_cast %8 : vector<8x32xf32> to vector<8x1x32xf32>
    %10 = vector.shape_cast %6 : vector<8x1x32xf32> to vector<1x8x1x32xf32>
    %11 = vector.broadcast %10 : vector<1x8x1x32xf32> to vector<1x8x4x32xf32>
    %12 = arith.mulf %0, %11 : vector<1x8x4x32xf32>
    %13 = vector.shape_cast %9 : vector<8x1x32xf32> to vector<1x8x1x32xf32>
    %14 = vector.broadcast %13 : vector<1x8x1x32xf32> to vector<1x8x4x32xf32>
    %15 = arith.mulf %3, %14 : vector<1x8x4x32xf32>
    %16 = arith.addf %12, %15 : vector<1x8x4x32xf32>
    %c0_8 = arith.constant 0 : index
    %c0_9 = arith.constant 0 : index
    %c0_10 = arith.constant 0 : index
    %c0_11 = arith.constant 0 : index
    %17 = vector.load %arg4[%c0_8, %c0_9, %c0_10, %c0_11] : memref<1x8x4x32xf32, #tpu.memory_space<vmem>>, vector<1x8x4x32xf32>
    tpu.vector_store %arg4[%c0_8, %c0_9, %c0_10, %c0_11], %16 {strides = array<i32>} : memref<1x8x4x32xf32, #tpu.memory_space<vmem>>, vector<1x8x4x32xf32>,
    return
  }
  func.func @transform_0(%arg0: i32, %arg1: i32) -> (i32, i32, i32, i32) {
    %c0_i32 = arith.constant 0 : i32
    %c0_i32_0 = arith.constant 0 : i32
    %c0_i32_1 = arith.constant 0 : i32
    return %arg1, %arg0, %c0_i32, %c0_i32_0 : i32, i32, i32, i32
  }
  func.func @transform_1(%arg0: i32, %arg1: i32) -> (i32, i32, i32) {
    %c0_i32 = arith.constant 0 : i32
    %c0_i32_0 = arith.constant 0 : i32
    %c0_i32_1 = arith.constant 0 : i32
    return %c0_i32, %arg0, %c0_i32_0 : i32, i32, i32
  }
  func.func @transform_2(%arg0: i32, %arg1: i32) -> (i32, i32, i32, i32) {
    %c0_i32 = arith.constant 0 : i32
    %c0_i32_0 = arith.constant 0 : i32
    %c0_i32_1 = arith.constant 0 : i32
    return %arg1, %arg0, %c0_i32, %c0_i32_0 : i32, i32, i32, i32
  }
}

</mosaic_0001>

<llo_original>
// kernel: tpu_custom_call.1
$region0: #{tpu_custom_call.1}
  #allocation0 [shape = 'u32[]', space=smem, size = 0x4, offset = 0x4, fixed_abs, tag = 'smem constant byte address 0x4 - core index']
  #allocation1 [shape = 'u32[72,128]{1,0:T(1,128)}', space=vmem, size = 0x9000, scoped, tag = 'internal scratch']
  %s0 = inlined_call_operand.hbm [shape: f32[2,8,4,32], index: 0, kind: input, shape index: {}]
  %s1 = inlined_call_operand.hbm [shape: f32[2,8,32], index: 1, kind: input, shape index: {}]
  %s2 = inlined_call_operand.hbm [shape: f32[2,8,4,32], index: 2, kind: output, shape index: {}]
  %s3 = sld [smem:[#allocation0]]
  $region49: #{tpu_custom_call.1} parent=0
    _
  %s5 = ssub.s32 1, %s3
  %s6 = scalar_select 0, %s5, %s3
  $region1: #{tpu_custom_call.1} parent=0
    #allocation2 [shape = 'u8[32768]{0}', space=vmem, size = 0x8000, scoped, tag = 'input window, operand 0']
    #allocation3 [shape = 's32[2]{0}', space=sflag, size = 0x8, scoped, tag = 'scoped memory for tpu_custom_call.1']
    #allocation4 [shape = 's32[2]{0}', space=sflag, size = 0x8, scoped, tag = 'scoped memory for tpu_custom_call.1']
    #allocation5 [shape = 'u8[8192]{0}', space=vmem, size = 0x2000, scoped, tag = 'input window, operand 1, single buffered']
    #allocation6 [shape = 's32[1]{0}', space=sflag, size = 0x4, scoped, tag = 'scoped memory for tpu_custom_call.1']
    #allocation7 [shape = 'u8[32768]{0}', space=vmem, size = 0x8000, scoped, tag = 'output window, operand 0']
    %7 = vsyncpa [#allocation3], 0
    %s8 = scalar_lea.sflag [#allocation3], 1
    %9 = vsyncpa %s8, 0
    %10 = vsyncpa [#allocation6], 0
    %11 = vsyncpa [#allocation4], 0
    %s12 = scalar_lea.sflag [#allocation4], 1
    %13 = vsyncpa %s12, 0
    loop: start=0, step=1, limit=4
    $region2: #{tpu_custom_call.1} parent=1 // loop_pre_header
      _
    $region3: #{tpu_custom_call.1} parent=1 // loop_header
      %s15 = sphi 0, %s19
      %p16 = scmp.ge.s32.totalorder %s15, 4
      %s22 = sphi 0, %s34
      %s23 = sphi 0, %s30
      %s24 = sphi 0, %s22
      %s25 = sphi 0, %s23
      %s26 = sphi 0, %s24
      %s27 = sphi 0, %s25
      %s39 = sphi 0, %s41
      %s42 = sphi 0, %s39
      %s43 = sphi 0, %s42
      %s59 = sphi 0, %s43
      %s65 = sphi 0, %s67
      %s68 = sphi 0, %s65
      %s69 = sphi 0, %s68
      %s85 = sphi 0, %s69
      %s93 = sphi 0, %s95
      %s96 = sphi 0, %s93
      %s97 = sphi 0, %s96
      %s113 = sphi 0, %s97
    $region4: #{tpu_custom_call.1} parent=1 // loop_header_branch
      %18 = sbr.rel (%p16) target = $region8
    $region5: #{tpu_custom_call.1} parent=1 // loop_body
      %s20 = ssub.s32 %s15, 1
      %s21 = ssub.s32 %s15, 2
      %s28 = sadd.s32 1, %s23
      %p29 = scmp.ge.s32.totalorder %s28, 2
      %s30 = scalar_select %p29, 0, %s28
      %s31 = sadd.s32 1, %s22
      %s32 = scalar_select %p29, %s31, %s22
      %p33 = scmp.ge.s32.totalorder %s32, 1
      %s34 = scalar_select %p33, 0, %s32
      %s35 = ssub.s32 %s23, %s30
      %s36 = ssub.s32 %s22, %s34
      %s37 = sor.u32 %s35, %s36
      %p38 = scmp.eq.s32.totalorder %s37, 0
      %s40 = sadd.s32 %s39, 1
      %s41 = scalar_select %p38, %s39, %s40
      %p44 = pneg %p38
      %p45 = scmp.eq.s32.totalorder %s15, 1
      %p46 = por %p44, %p45
      %p47 = scmp.ne.s32.totalorder %s39, %s42
      %p48 = scmp.eq.s32.totalorder %s15, 0
      %p49 = por %p47, %p48
      %p50 = scmp.ne.s32.totalorder %s39, %s42
      %p51 = scmp.eq.s32.totalorder %s20, 1
      %p52 = por %p50, %p51
      %p53 = scmp.ne.s32.totalorder %s42, %s43
      %p54 = scmp.eq.s32.totalorder %s20, 0
      %p55 = por %p53, %p54
      %p56 = scmp.ne.s32.totalorder %s42, %s43
      %p57 = scmp.eq.s32.totalorder %s21, 1
      %p58 = por %p56, %p57
      %p60 = scmp.ne.s32.totalorder %s43, %s59
      %p61 = scmp.eq.s32.totalorder %s21, 0
      %p62 = por %p60, %p61
      %s63 = ssub.s32 %s22, %s34
      %p64 = scmp.eq.s32.totalorder %s63, 0
      %s66 = sadd.s32 %s65, 1
      %s67 = scalar_select %p64, %s65, %s66
      %p70 = pneg %p64
      %p71 = scmp.eq.s32.totalorder %s15, 1
      %p72 = por %p70, %p71
      %p73 = scmp.ne.s32.totalorder %s65, %s68
      %p74 = scmp.eq.s32.totalorder %s15, 0
      %p75 = por %p73, %p74
      %p76 = scmp.ne.s32.totalorder %s65, %s68
      %p77 = scmp.eq.s32.totalorder %s20, 1
      %p78 = por %p76, %p77
      %p79 = scmp.ne.s32.totalorder %s68, %s69
      %p80 = scmp.eq.s32.totalorder %s20, 0
      %p81 = por %p79, %p80
      %p82 = scmp.ne.s32.totalorder %s68, %s69
      %p83 = scmp.eq.s32.totalorder %s21, 1
      %p84 = por %p82, %p83
      %p86 = scmp.ne.s32.totalorder %s69, %s85
      %p87 = scmp.eq.s32.totalorder %s21, 0
      %p88 = por %p86, %p87
      %s89 = ssub.s32 %s23, %s30
      %s90 = ssub.s32 %s22, %s34
      %s91 = sor.u32 %s89, %s90
      %p92 = scmp.eq.s32.totalorder %s91, 0
      %s94 = sadd.s32 %s93, 1
      %s95 = scalar_select %p92, %s93, %s94
      %p98 = pneg %p92
      %p99 = scmp.eq.s32.totalorder %s15, 1
      %p100 = por %p98, %p99
      %p101 = scmp.ne.s32.totalorder %s93, %s96
      %p102 = scmp.eq.s32.totalorder %s15, 0
      %p103 = por %p101, %p102
      %p104 = scmp.ne.s32.totalorder %s93, %s96
      %p105 = scmp.eq.s32.totalorder %s20, 1
      %p106 = por %p104, %p105
      %p107 = scmp.ne.s32.totalorder %s96, %s97
      %p108 = scmp.eq.s32.totalorder %s20, 0
      %p109 = por %p107, %p108
      %p110 = scmp.ne.s32.totalorder %s96, %s97
      %p111 = scmp.eq.s32.totalorder %s21, 1
      %p112 = por %p110, %p111
      %p114 = scmp.ne.s32.totalorder %s97, %s113
      %p115 = scmp.eq.s32.totalorder %s21, 0
      %p116 = por %p114, %p115
      %p117 = scmp.le.s32.totalorder 1, %s15
      %p118 = scmp.lt.s32.totalorder %s15, 3
      %p119 = pnand %p117, %p118
      %p120 = pneg %p119
      // Predicated region
      $region9: #{tpu_custom_call.1} parent=5 // pred_check
        _
      $region10: #{tpu_custom_call.1} parent=5 // pred_check_branch
        %122 = sbr.rel (%p119) target = $region12
      $region11: #{tpu_custom_call.1} parent=5 // pred_region
        %s123 = ssub.s32 %s15, 1
        // Predicated region
        $region13: #{tpu_custom_call.1} parent=11 // pred_check
          %p124 = pneg %p81
        $region14: #{tpu_custom_call.1} parent=11 // pred_check_branch
          %126 = sbr.rel (%p124) target = $region16
        $region15: #{tpu_custom_call.1} parent=11 // pred_region
          %128 = vsyncadd [#allocation6], 0
          %s129 = smul.addr %s24, 8
          %s130 = scalar_lea.hbm %s1, %s129
          %s131 = sshll.u32 %s130, 4
          %s132 = int_to_ptr.hbm [resolvable:$true] %s131
          %s133 = sshll.u32 [#allocation5], 4
          %s134 = int_to_ptr.vmem [resolvable:$true] %s133
          %139 = dma.hbm_to_vmem [thread:$0]  %s132, 256, %s134, [#allocation6], 128, 128, 8
        $region16: #{tpu_custom_call.1} parent=11 // pred_fallthru
          _
      $region12: #{tpu_custom_call.1} parent=5 // pred_fallthru
        _
      %p140 = scmp.lt.s32.totalorder %s15, 2
      // Predicated region
      $region17: #{tpu_custom_call.1} parent=5 // pred_check
        %p141 = pneg %p140
      $region18: #{tpu_custom_call.1} parent=5 // pred_check_branch
        %143 = sbr.rel (%p141) target = $region20
      $region19: #{tpu_custom_call.1} parent=5 // pred_region
        // Predicated region
        $region21: #{tpu_custom_call.1} parent=19 // pred_check
          %p144 = pneg %p49
        $region22: #{tpu_custom_call.1} parent=19 // pred_check_branch
          %146 = sbr.rel (%p144) target = $region24
        $region23: #{tpu_custom_call.1} parent=19 // pred_region
          %s147 = sand.u32 %s39, 1
          %s148 = scalar_lea.sflag [#allocation3], %s147
          %s149 = sand.u32 %s39, 1
          %s150 = smul.addr %s149, 32
          %s151 = scalar_lea.vmem [#allocation2], %s150
          %s152 = smul.u32 8, %s22
          %154 = vsyncadd %s148, 0
          %s155 = smul.addr %s23, 8
          %s156 = sadd.s32 %s152, %s155
          %s157 = smul.addr %s156, 4
          %s158 = scalar_lea.hbm %s0, %s157
          %s159 = sshll.u32 %s158, 4
          %s160 = int_to_ptr.hbm [resolvable:$true] %s159
          %s161 = sshll.u32 %s151, 4
          %s162 = int_to_ptr.vmem [resolvable:$true] %s161
          %167 = dma.hbm_to_vmem [thread:$0]  %s160, 512, %s162, %s148, 64, 64, 4
        $region24: #{tpu_custom_call.1} parent=19 // pred_fallthru
          _
      $region20: #{tpu_custom_call.1} parent=5 // pred_fallthru
        _
      %p168 = scmp.le.s32.totalorder 1, %s15
      %p169 = scmp.lt.s32.totalorder %s15, 3
      %p170 = pnand %p168, %p169
      %p171 = pneg %p170
      // Predicated region
      $region25: #{tpu_custom_call.1} parent=5 // pred_check
        _
      $region26: #{tpu_custom_call.1} parent=5 // pred_check_branch
        %173 = sbr.rel (%p170) target = $region28
      $region27: #{tpu_custom_call.1} parent=5 // pred_region
        %s174 = ssub.s32 %s15, 1
        %s175 = sand.u32 %s42, 1
        %s176 = scalar_lea.sflag [#allocation3], %s175
        %s177 = sand.u32 %s42, 1
        %s178 = smul.addr %s177, 32
        %s179 = scalar_lea.vmem [#allocation2], %s178
        // Predicated region
        $region29: #{tpu_custom_call.1} parent=27 // pred_check
          %p180 = pneg %p55
        $region30: #{tpu_custom_call.1} parent=27 // pred_check_branch
          %182 = sbr.rel (%p180) target = $region32
        $region31: #{tpu_custom_call.1} parent=27 // pred_region
          %184 = dma.done %s176, 512
        $region32: #{tpu_custom_call.1} parent=27 // pred_fallthru
          _
        // Predicated region
        $region33: #{tpu_custom_call.1} parent=27 // pred_check
          %p185 = pneg %p81
        $region34: #{tpu_custom_call.1} parent=27 // pred_check_branch
          %187 = sbr.rel (%p185) target = $region36
        $region35: #{tpu_custom_call.1} parent=27 // pred_region
          %189 = dma.done [#allocation6], 256
        $region36: #{tpu_custom_call.1} parent=27 // pred_fallthru
          _
        %s190 = sand.u32 %s42, 1
        %s191 = scalar_lea.sflag [#allocation3], %s190
        %s192 = sand.u32 %s42, 1
        %s193 = smul.addr %s192, 32
        %s194 = scalar_lea.vmem [#allocation2], %s193
        %p195 = pneg %p55
        %p196 = pneg %p52
        %p197 = pneg %p81
        %p198 = pneg %p78
        %p199 = pneg %p109
        %p200 = pneg %p106
        %s201 = sand.u32 %s96, 1
        %s202 = scalar_lea.sflag [#allocation4], %s201
        %s203 = sand.u32 %s96, 1
        %s204 = smul.addr %s203, 32
        %s205 = scalar_lea.vmem [#allocation7], %s204
        %s206 = smul.u32 8, %s24
        %s207 = smul.u32 8, %s24
        %v208 = vld [vmem:[%s179] sm:$0xf]
        %v209 = vld [vmem:[%s179 + $0x4] sm:$0xf]
        %v210 = vld [vmem:[%s179 + $0x8] sm:$0xf]
        %v211 = vld [vmem:[%s179 + $0xc] sm:$0xf]
        %v212 = vld [vmem:[%s179 + $0x10] sm:$0xf]
        %v213 = vld [vmem:[%s179 + $0x14] sm:$0xf]
        %v214 = vld [vmem:[%s179 + $0x18] sm:$0xf]
        %v215 = vld [vmem:[%s179 + $0x1c] sm:$0xf]
        %224 = vrot.lane.b32.xlu0 %v208, 112
        %v225 = vpop.permute.xlu0 %224
        %226 = vrot.lane.b32.xlu0 %v209, 112
        %v227 = vpop.permute.xlu0 %226
        %228 = vrot.lane.b32.xlu0 %v210, 112
        %v229 = vpop.permute.xlu0 %228
        %230 = vrot.lane.b32.xlu0 %v211, 112
        %v231 = vpop.permute.xlu0 %230
        %232 = vrot.lane.b32.xlu0 %v212, 112
        %v233 = vpop.permute.xlu0 %232
        %234 = vrot.lane.b32.xlu0 %v213, 112
        %v235 = vpop.permute.xlu0 %234
        %236 = vrot.lane.b32.xlu0 %v214, 112
        %v237 = vpop.permute.xlu0 %236
        %238 = vrot.lane.b32.xlu0 %v215, 112
        %v239 = vpop.permute.xlu0 %238
        %248 = vrot.lane.b32.xlu0 %v208, 16
        %v249 = vpop.permute.xlu0 %248
        %250 = vrot.lane.b32.xlu0 %v209, 16
        %v251 = vpop.permute.xlu0 %250
        %252 = vrot.lane.b32.xlu0 %v210, 16
        %v253 = vpop.permute.xlu0 %252
        %254 = vrot.lane.b32.xlu0 %v211, 16
        %v255 = vpop.permute.xlu0 %254
        %256 = vrot.lane.b32.xlu0 %v212, 16
        %v257 = vpop.permute.xlu0 %256
        %258 = vrot.lane.b32.xlu0 %v213, 16
        %v259 = vpop.permute.xlu0 %258
        %260 = vrot.lane.b32.xlu0 %v214, 16
        %v261 = vpop.permute.xlu0 %260
        %262 = vrot.lane.b32.xlu0 %v215, 16
        %v263 = vpop.permute.xlu0 %262
        %vm272 = vcmask 130048
        %v273 = vsel %vm272, %v225, %v249
        %v274 = vsel %vm272, %v227, %v251
        %v275 = vsel %vm272, %v229, %v253
        %v276 = vsel %vm272, %v231, %v255
        %v277 = vsel %vm272, %v233, %v257
        %v278 = vsel %vm272, %v235, %v259
        %v279 = vsel %vm272, %v237, %v261
        %v280 = vsel %vm272, %v239, %v263
        %v281 = vld [vmem:[#allocation5] sm:$0xff]
        %s282 = scalar_lea.vmem [#allocation5], 8
        %v283 = vld [vmem:[%s282] sm:$0xff]
        %v285 = vrot.slane %v281, 1
        %v286 = vrot.slane %v281, 2
        %v287 = vrot.slane %v281, 3
        %v288 = vrot.slane %v281, 4
        %v289 = vrot.slane %v281, 5
        %v290 = vrot.slane %v281, 6
        %v291 = vrot.slane %v281, 7
        %v292 = vperm.slane %v281, 0
        %v293 = vperm.slane %v285, 0
        %v294 = vperm.slane %v286, 0
        %v295 = vperm.slane %v287, 0
        %v296 = vperm.slane %v288, 0
        %v297 = vperm.slane %v289, 0
        %v298 = vperm.slane %v290, 0
        %v299 = vperm.slane %v291, 0
        %v308 = vmul.f32 %v208, %v292
        %v309 = vmul.f32 %v209, %v293
        %v310 = vmul.f32 %v210, %v294
        %v311 = vmul.f32 %v211, %v295
        %v312 = vmul.f32 %v212, %v296
        %v313 = vmul.f32 %v213, %v297
        %v314 = vmul.f32 %v214, %v298
        %v315 = vmul.f32 %v215, %v299
        %v317 = vrot.slane %v283, 1
        %v318 = vrot.slane %v283, 2
        %v319 = vrot.slane %v283, 3
        %v320 = vrot.slane %v283, 4
        %v321 = vrot.slane %v283, 5
        %v322 = vrot.slane %v283, 6
        %v323 = vrot.slane %v283, 7
        %v324 = vperm.slane %v283, 0
        %v325 = vperm.slane %v317, 0
        %v326 = vperm.slane %v318, 0
        %v327 = vperm.slane %v319, 0
        %v328 = vperm.slane %v320, 0
        %v329 = vperm.slane %v321, 0
        %v330 = vperm.slane %v322, 0
        %v331 = vperm.slane %v323, 0
        %v340 = vmul.f32 %v273, %v324
        %v341 = vmul.f32 %v274, %v325
        %v342 = vmul.f32 %v275, %v326
        %v343 = vmul.f32 %v276, %v327
        %v344 = vmul.f32 %v277, %v328
        %v345 = vmul.f32 %v278, %v329
        %v346 = vmul.f32 %v279, %v330
        %v347 = vmul.f32 %v280, %v331
        %v348 = vadd.f32 %v308, %v340
        %v349 = vadd.f32 %v309, %v341
        %v350 = vadd.f32 %v310, %v342
        %v351 = vadd.f32 %v311, %v343
        %v352 = vadd.f32 %v312, %v344
        %v353 = vadd.f32 %v313, %v345
        %v354 = vadd.f32 %v314, %v346
        %v355 = vadd.f32 %v315, %v347
        %vm356 = vcmask 257024
        %357 = vst.msk [vmem:[%s205] sm:$0xf] %vm356, %v348
        %358 = vst.msk [vmem:[%s205 + $0x4] sm:$0xf] %vm356, %v349
        %359 = vst.msk [vmem:[%s205 + $0x8] sm:$0xf] %vm356, %v350
        %360 = vst.msk [vmem:[%s205 + $0xc] sm:$0xf] %vm356, %v351
        %361 = vst.msk [vmem:[%s205 + $0x10] sm:$0xf] %vm356, %v352
        %362 = vst.msk [vmem:[%s205 + $0x14] sm:$0xf] %vm356, %v353
        %363 = vst.msk [vmem:[%s205 + $0x18] sm:$0xf] %vm356, %v354
        %364 = vst.msk [vmem:[%s205 + $0x1c] sm:$0xf] %vm356, %v355
        %s365 = sand.u32 %s96, 1
        %s366 = scalar_lea.sflag [#allocation4], %s365
        %s367 = sand.u32 %s96, 1
        %s368 = smul.addr %s367, 32
        %s369 = scalar_lea.vmem [#allocation7], %s368
        // Predicated region
        $region37: #{tpu_custom_call.1} parent=27 // pred_check
          %p370 = pneg %p106
        $region38: #{tpu_custom_call.1} parent=27 // pred_check_branch
          %372 = sbr.rel (%p370) target = $region40
        $region39: #{tpu_custom_call.1} parent=27 // pred_region
          %s373 = smul.u32 8, %s24
          %375 = vsyncadd %s366, 0
          %s376 = smul.addr %s25, 8
          %s377 = sadd.s32 %s373, %s376
          %s378 = smul.addr %s377, 4
          %s379 = scalar_lea.hbm %s2, %s378
          %s380 = sshll.u32 %s369, 4
          %s381 = int_to_ptr.vmem [resolvable:$true] %s380
          %s382 = sshll.u32 %s379, 4
          %s383 = int_to_ptr.hbm [resolvable:$true] %s382
          %388 = dma.vmem_to_hbm [thread:$0]  %s381, 512, %s383, %s366, 64, 64, 4
        $region40: #{tpu_custom_call.1} parent=27 // pred_fallthru
          _
      $region28: #{tpu_custom_call.1} parent=5 // pred_fallthru
        _
      %p389 = scmp.le.s32.totalorder 2, %s15
      // Predicated region
      $region41: #{tpu_custom_call.1} parent=5 // pred_check
        %p390 = pneg %p389
      $region42: #{tpu_custom_call.1} parent=5 // pred_check_branch
        %392 = sbr.rel (%p390) target = $region44
      $region43: #{tpu_custom_call.1} parent=5 // pred_region
        %s393 = ssub.s32 %s15, 2
        // Predicated region
        $region45: #{tpu_custom_call.1} parent=43 // pred_check
          %p394 = pneg %p112
        $region46: #{tpu_custom_call.1} parent=43 // pred_check_branch
          %396 = sbr.rel (%p394) target = $region48
        $region47: #{tpu_custom_call.1} parent=43 // pred_region
          %s397 = sand.u32 %s97, 1
          %s398 = scalar_lea.sflag [#allocation4], %s397
          %s399 = sand.u32 %s97, 1
          %s400 = smul.addr %s399, 32
          %s401 = scalar_lea.vmem [#allocation7], %s400
          %403 = dma.done %s398, 512
        $region48: #{tpu_custom_call.1} parent=43 // pred_fallthru
          _
      $region44: #{tpu_custom_call.1} parent=5 // pred_fallthru
        _
    $region6: #{tpu_custom_call.1} parent=1 // loop_footer
      %s19 = sadd.s32 1, %s15
    $region7: #{tpu_custom_call.1} parent=1 // loop_footer_branch
      %14 = sbr.rel target = $region3
    $region8: #{tpu_custom_call.1} parent=1 // loop_exit
      _
    %404 = vsyncpa [#allocation3], 1
    %s405 = scalar_lea.sflag [#allocation3], 1
    %406 = vsyncpa %s405, 1
    %407 = vsyncpa [#allocation6], 1
    %408 = vsyncpa [#allocation4], 1
    %s409 = scalar_lea.sflag [#allocation4], 1
    %410 = vsyncpa %s409, 1

</llo_original>
